<compile_context>
chip_gen: v7x
topology: tpu7x:2x2x1
jax: 0.10.0
libtpu: 0.0.40
codegen_flags: <defaults>
</compile_context>

<pallas_src>
from functools import partial

import numpy as np
import jax
import jax.numpy as jnp
from jax.experimental import pallas as pl
from jax.experimental.pallas import tpu as pltpu

_BN_EPS = 1e-5


def _vmem_limit_bytes():
    """Generation-aware VMEM limit (3/4 of capacity; falls back to 48 MiB)."""
    try:
        cap = getattr(pltpu.get_tpu_info(), "vmem_capacity_bytes",
                      64 * 1024 * 1024)
    except Exception:
        cap = 64 * 1024 * 1024
    return int(cap * 3 // 4)


def _pick_spatial_tile(P):
    """Largest multiple-of-128 divisor of P (capped at 2048 lanes), preferring
    >= 2 tiles per batch element for pipeline depth / dual-TensorCore."""
    if P % 128 != 0:
        return P
    cands = [c for c in range(128, min(P, 2048) + 1, 128) if P % c == 0]
    tile = max(cands)
    if tile == P and len(cands) > 1:
        tile = max(c for c in cands if c < P)
    return tile


def _make_conv_stats_kernel(*, KH, KW, W, pad, dil, P_TILE, PADL, WIN):
    """Fused-tap conv (one MXU matmul per spatial tile) + partial BN stats."""

    def kernel(x_ref, w_ref, cmask_ref, vmask_ref, y_ref, s_ref, q_ref):
        # x_ref     : (1, C_pad, PADTOT)   flat-padded CHW row of batch n (resident)
        # w_ref     : (F_sub, KH*KW*C_pad) taps folded into the contraction dim
        # cmask_ref : (KW, P_TILE)         column-validity mask per W-tap
        # vmask_ref : (1, P_TILE)          output-position validity (stride / OH / OW)
        # y_ref     : (1, F_sub, P_TILE)   conv result: F on sublanes, spatial on lanes
        # s_ref/q_ref: (1, 1, F_sub, 1)    per-step partial sum / sum-of-squares
        t = pl.program_id(1)
        base = t * P_TILE
        if P_TILE % 128 == 0:
            base = pl.multiple_of(base, 128)        # aligned dynamic lane offset
        win = x_ref[0, :, pl.ds(base, WIN)]         # (C_pad, WIN): tile + halo
        cm = cmask_ref[...]                         # (KW, P_TILE)

        # im2col in VMEM/vregs only: KH*KW shifted+masked views stacked along
        # sublanes -> single MXU matmul with contraction depth KH*KW*C_pad.
        pieces = []
        for kh in range(KH):
            for kw in range(KW):
                off = PADL + (kh * dil - pad) * W + (kw * dil - pad)  # static, >= 0
                pieces.append(win[:, off:off + P_TILE] * cm[kw:kw + 1, :])
        patch = jnp.concatenate(pieces, axis=0)     # (KH*KW*C_pad, P_TILE)

        y = jnp.dot(w_ref[...], patch, preferred_element_type=jnp.float32)
        y_ref[0] = y                                # compact, lane-dense store

        # Per-filter partial statistics over valid output positions only.
        yv = y * vmask_ref[...]
        s_ref[0, 0] = jnp.sum(yv, axis=1, keepdims=True)
        q_ref[0, 0] = jnp.sum(yv * y, axis=1, keepdims=True)

    return kernel


def _bn_apply_kernel(y_ref, sc_ref, sh_ref, o_ref):
    # One FMA per element; scale/shift are (1, F_sub, 1), broadcast over lanes.
    o_ref[...] = y_ref[...] * sc_ref[...] + sh_ref[...]


@partial(jax.jit, static_argnames=("stride", "padding", "dilation"))
def conv2d_batchnorm(x, weight, bias, gamma, beta, *,
                     stride=1, padding=1, dilation=1):
    """x: [N, C, H, W] (NCHW, like PyTorch). weight: [F, C, KH, KW]."""
    N, C, H, W = x.shape
    F, C_w, KH, KW = weight.shape
    assert C == C_w
    OH = (H + 2 * padding - dilation * (KH - 1) - 1) // stride + 1
    OW = (W + 2 * padding - dilation * (KW - 1) - 1) // stride + 1
    assert OH >= 1 and OW >= 1
    # The conv is evaluated on the full stride-1 H x W grid (constant-shift
    # trick on the flattened spatial axis); every true output position must
    # live on that grid.
    assert (OH - 1) * stride <= H - 1 and (OW - 1) * stride <= W - 1, \
        "over-padded configuration not supported"
    # TODO(synk): stride > 1 is handled by computing the stride-1 grid and
    # subsampling (correct, but does stride^2 more MXU work than necessary).

    P = H * W
    M = N * OH * OW
    C_pad = ((C + 7) // 8) * 8
    F_sub = ((F + 7) // 8) * 8
    KKC = KH * KW * C_pad

    PADL = padding * W + padding
    shift_max = ((KH - 1) * dilation - padding) * W + ((KW - 1) * dilation - padding)
    PADR = max(0, shift_max)
    PADTOT = PADL + P + PADR

    P_TILE = _pick_spatial_tile(P)
    NT = P // P_TILE
    WIN = P_TILE + PADL + PADR

    # ---- layout plumbing: NO transpose; one fused pad over the flat CHW view ----
    x3 = x.astype(jnp.float32).reshape(N, C, P)
    xpad = jnp.pad(x3, ((0, 0), (0, C_pad - C), (PADL, PADR)))
    # TODO(synk): this flat zero-pad could be moved in-kernel (pl.ANY + manual
    # DMA into a zeroed VMEM scratch) to save one extra pass over x.

    wt = jnp.transpose(weight.astype(jnp.float32), (0, 2, 3, 1))         # (F,KH,KW,C)
    wt = jnp.pad(wt, ((0, F_sub - F), (0, 0), (0, 0), (0, C_pad - C)))
    w2d = wt.reshape(F_sub, KKC)                                         # tap-fused

    # Conv bias is a mathematical no-op under batch-statistics BatchNorm
    # (cancelled by the mean subtraction, no effect on the variance) -> dropped.
    del bias
    # TODO(synk): BatchNorm2d running_mean/running_var buffer updates (module
    # training state) are not produced; running_mean would also need the bias.

    # Host-side constant masks (tiny, baked into the executable).
    col = np.arange(W)
    src = col[None, :] + (np.arange(KW) * dilation - padding)[:, None]   # (KW, W)
    cmask = np.tile(((src >= 0) & (src < W)).astype(np.float32), (1, H)) # (KW, P)
    row_ok = (np.arange(H) % stride == 0) & (np.arange(H) // stride < OH)
    col_ok = (np.arange(W) % stride == 0) & (np.arange(W) // stride < OW)
    vmask = (row_ok[:, None] & col_ok[None, :]).reshape(1, P).astype(np.float32)
    cmask = jnp.asarray(cmask)
    vmask = jnp.asarray(vmask)

    vlim = _vmem_limit_bytes()

    # ---------------- Phase 1: fused-tap conv + partial BN stats ----------------
    conv_kernel = _make_conv_stats_kernel(
        KH=KH, KW=KW, W=W, pad=padding, dil=dilation,
        P_TILE=P_TILE, PADL=PADL, WIN=WIN)

    y, sum_p, sq_p = pl.pallas_call(
        conv_kernel,
        grid=(N, NT),
        in_specs=[
            pl.BlockSpec((1, C_pad, PADTOT), lambda n, t: (n, 0, 0)),  # resident per n
            pl.BlockSpec((F_sub, KKC), lambda n, t: (0, 0)),
            pl.BlockSpec((KW, P_TILE), lambda n, t: (0, t)),
            pl.BlockSpec((1, P_TILE), lambda n, t: (0, t)),
        ],
        out_specs=(
            pl.BlockSpec((1, F_sub, P_TILE), lambda n, t: (n, 0, t)),
            pl.BlockSpec((1, 1, F_sub, 1), lambda n, t: (n, t, 0, 0)),
            pl.BlockSpec((1, 1, F_sub, 1), lambda n, t: (n, t, 0, 0)),
        ),
        out_shape=(
            jax.ShapeDtypeStruct((N, F_sub, P), jnp.float32),
            jax.ShapeDtypeStruct((N, NT, F_sub, 1), jnp.float32),
            jax.ShapeDtypeStruct((N, NT, F_sub, 1), jnp.float32),
        ),
        compiler_params=pltpu.CompilerParams(
            dimension_semantics=("parallel", "parallel"),
            vmem_limit_bytes=vlim),
        cost_estimate=pl.CostEstimate(                      # true C / F, not padded
            flops=2 * N * P * C * KH * KW * F,
            transcendentals=0,
            bytes_accessed=4 * (xpad.size + w2d.size + N * F_sub * P
                                + 2 * N * NT * F_sub)),
    )(xpad, w2d, cmask, vmask)

    # ---------------- Finalize stats + fold the BN affine (O(F) work) ----------------
    ssum = jnp.sum(sum_p, axis=(0, 1)).reshape(F_sub)
    ssq = jnp.sum(sq_p, axis=(0, 1)).reshape(F_sub)
    mean = ssum / M
    # NOTE: E[y^2]-E[y]^2 in f32; adequate at these scales (a Welford/shifted
    # accumulation would be safer if tolerances tighten).
    var = jnp.maximum(ssq / M - mean * mean, 0.0)           # biased variance
    inv_std = jax.lax.rsqrt(var + _BN_EPS)
    gamma_p = jnp.pad(gamma.astype(jnp.float32), (0, F_sub - F))
    beta_p = jnp.pad(beta.astype(jnp.float32), (0, F_sub - F))
    scale_vec = gamma_p * inv_std
    shift_vec = beta_p - mean * scale_vec
    scale = scale_vec.reshape(1, F_sub, 1)
    shift = shift_vec.reshape(1, F_sub, 1)

    # ---------------- Phase 2: in-place scale/shift on the compact slab ----------------
    y_bn = pl.pallas_call(
        _bn_apply_kernel,
        grid=(N, NT),
        in_specs=[
            pl.BlockSpec((1, F_sub, P_TILE), lambda n, t: (n, 0, t)),
            pl.BlockSpec((1, F_sub, 1), lambda n, t: (0, 0, 0)),
            pl.BlockSpec((1, F_sub, 1), lambda n, t: (0, 0, 0)),
        ],
        out_specs=pl.BlockSpec((1, F_sub, P_TILE), lambda n, t: (n, 0, t)),
        out_shape=jax.ShapeDtypeStruct((N, F_sub, P), jnp.float32),
        input_output_aliases={0: 0},                       # normalize y in place
        compiler_params=pltpu.CompilerParams(
            dimension_semantics=("parallel", "parallel"),
            vmem_limit_bytes=vlim),
        cost_estimate=pl.CostEstimate(
            flops=2 * N * F_sub * P,
            transcendentals=0,
            bytes_accessed=4 * (2 * N * F_sub * P + 2 * F_sub)),
    )(y, scale, shift)

    # Already NCHW-ordered: un-flatten, subsample the stride grid, strip the
    # filter padding.  No transpose pass.
    out = y_bn.reshape(N, F_sub, H, W)
    out = out[:, :F, :(OH - 1) * stride + 1:stride, :(OW - 1) * stride + 1:stride]
    return out


def _reference(x, weight, bias, gamma, beta, *, stride=1, padding=1, dilation=1):
    y = jax.lax.conv_general_dilated(
        x, weight, window_strides=(stride, stride),
        padding=((padding, padding), (padding, padding)),
        rhs_dilation=(dilation, dilation),
        dimension_numbers=("NCHW", "OIHW", "NCHW"))
    y = y + bias[None, :, None, None]
    mean = y.mean(axis=(0, 2, 3), keepdims=True)
    var = ((y - mean) ** 2).mean(axis=(0, 2, 3), keepdims=True)  # biased
    y = (y - mean) * jax.lax.rsqrt(var + _BN_EPS)
    return gamma[None, :, None, None] * y + beta[None, :, None, None]


if __name__ == "__main__":
    # conv2DBatchNorm(in_channels=4, n_filters=8, k_size=3, stride=1,
    #                 padding=1, bias=True, dilation=1, with_bn=True)
    N, C_in, H, W = 2, 4, 16, 16
    F_out, K = 8, 3

    key = jax.random.PRNGKey(0)
    kx, kw_, kb = jax.random.split(key, 3)
    x = jax.random.normal(kx, (N, C_in, H, W), dtype=jnp.float32)
    weight = 0.1 * jax.random.normal(kw_, (F_out, C_in, K, K), dtype=jnp.float32)
    bias = 0.1 * jax.random.normal(kb, (F_out,), dtype=jnp.float32)
    gamma = jnp.ones((F_out,), dtype=jnp.float32)    # BatchNorm2d default init
    beta = jnp.zeros((F_out,), dtype=jnp.float32)

    out = conv2d_batchnorm(x, weight, bias, gamma, beta,
                           stride=1, padding=1, dilation=1)
    out = jax.block_until_ready(out)

    ref = _reference(x, weight, bias, gamma, beta,
                     stride=1, padding=1, dilation=1)
    assert out.shape == (N, F_out, H, W), out.shape
    assert jnp.allclose(out, ref, atol=1e-4, rtol=1e-4), "mismatch vs reference"

    print("KERNEL_OK")
</pallas_src>

<mosaic_0001>
module attributes {stable_mosaic.version = 11 : i64} {
  func.func @_bn_apply_kernel(%arg0: i32, %arg1: i32, %arg2: memref<1x8x128xf32, #tpu.memory_space<vmem>>, %arg3: memref<1x8x1xf32, #tpu.memory_space<vmem>>, %arg4: memref<1x8x1xf32, #tpu.memory_space<vmem>>, %arg5: memref<1x8x128xf32, #tpu.memory_space<vmem>>) attributes {dimension_semantics = [#tpu.dimension_semantics<parallel>, #tpu.dimension_semantics<parallel>], iteration_bounds = array<i64: 2, 2>, scalar_prefetch = 0 : i64, scratch_operands = 0 : i64, tpu.core_type = #tpu.core_type<tc>, window_params = [{transform_indices = @transform_0, window_bounds = array<i64: 1, 8, 128>}, {pipeline_mode = #tpu.pipeline_mode<synchronous>, transform_indices = @transform_1, window_bounds = array<i64: 1, 8, 1>}, {pipeline_mode = #tpu.pipeline_mode<synchronous>, transform_indices = @transform_2, window_bounds = array<i64: 1, 8, 1>}, {transform_indices = @transform_3, window_bounds = array<i64: 1, 8, 128>}]} {
    %c0 = arith.constant 0 : index
    %c0_0 = arith.constant 0 : index
    %c0_1 = arith.constant 0 : index
    %0 = vector.load %arg2[%c0, %c0_0, %c0_1] : memref<1x8x128xf32, #tpu.memory_space<vmem>>, vector<1x8x128xf32>
    %c0_2 = arith.constant 0 : index
    %c0_3 = arith.constant 0 : index
    %c0_4 = arith.constant 0 : index
    %1 = vector.load %arg3[%c0_2, %c0_3, %c0_4] : memref<1x8x1xf32, #tpu.memory_space<vmem>>, vector<1x8x1xf32>
    %2 = vector.broadcast %1 : vector<1x8x1xf32> to vector<1x8x128xf32>
    %3 = arith.mulf %0, %2 : vector<1x8x128xf32>
    %c0_5 = arith.constant 0 : index
    %c0_6 = arith.constant 0 : index
    %c0_7 = arith.constant 0 : index
    %4 = vector.load %arg4[%c0_5, %c0_6, %c0_7] : memref<1x8x1xf32, #tpu.memory_space<vmem>>, vector<1x8x1xf32>
    %5 = vector.broadcast %4 : vector<1x8x1xf32> to vector<1x8x128xf32>
    %6 = arith.addf %3, %5 : vector<1x8x128xf32>
    %c0_8 = arith.constant 0 : index
    %c0_9 = arith.constant 0 : index
    %c0_10 = arith.constant 0 : index
    %7 = vector.load %arg5[%c0_8, %c0_9, %c0_10] : memref<1x8x128xf32, #tpu.memory_space<vmem>>, vector<1x8x128xf32>
    tpu.vector_store %arg5[%c0_8, %c0_9, %c0_10], %6 {strides = array<i32>} : memref<1x8x128xf32, #tpu.memory_space<vmem>>, vector<1x8x128xf32>,
    return
  }
  func.func @transform_0(%arg0: i32, %arg1: i32) -> (i32, i32, i32) {
    %c0_i32 = arith.constant 0 : i32
    %c0_i32_0 = arith.constant 0 : i32
    return %arg0, %c0_i32, %arg1 : i32, i32, i32
  }
  func.func @transform_1(%arg0: i32, %arg1: i32) -> (i32, i32, i32) {
    %c0_i32 = arith.constant 0 : i32
    %c0_i32_0 = arith.constant 0 : i32
    %c0_i32_1 = arith.constant 0 : i32
    %c0_i32_2 = arith.constant 0 : i32
    return %c0_i32, %c0_i32_0, %c0_i32_1 : i32, i32, i32
  }
  func.func @transform_2(%arg0: i32, %arg1: i32) -> (i32, i32, i32) {
    %c0_i32 = arith.constant 0 : i32
    %c0_i32_0 = arith.constant 0 : i32
    %c0_i32_1 = arith.constant 0 : i32
    %c0_i32_2 = arith.constant 0 : i32
    return %c0_i32, %c0_i32_0, %c0_i32_1 : i32, i32, i32
  }
  func.func @transform_3(%arg0: i32, %arg1: i32) -> (i32, i32, i32) {
    %c0_i32 = arith.constant 0 : i32
    %c0_i32_0 = arith.constant 0 : i32
    return %arg0, %c0_i32, %arg1 : i32, i32, i32
  }
}

module attributes {stable_mosaic.version = 11 : i64} {
  func.func @kernel(%arg0: i32, %arg1: i32, %arg2: memref<1x8x290xf32, #tpu.memory_space<vmem>>, %arg3: memref<8x72xf32, #tpu.memory_space<vmem>>, %arg4: memref<3x128xf32, #tpu.memory_space<vmem>>, %arg5: memref<1x128xf32, #tpu.memory_space<vmem>>, %arg6: memref<1x8x128xf32, #tpu.memory_space<vmem>>, %arg7: memref<1x1x8x1xf32, #tpu.memory_space<vmem>>, %arg8: memref<1x1x8x1xf32, #tpu.memory_space<vmem>>) attributes {dimension_semantics = [#tpu.dimension_semantics<parallel>, #tpu.dimension_semantics<parallel>], iteration_bounds = array<i64: 2, 2>, scalar_prefetch = 0 : i64, scratch_operands = 0 : i64, tpu.core_type = #tpu.core_type<tc>, window_params = [{transform_indices = @transform_0, window_bounds = array<i64: 1, 8, 290>}, {pipeline_mode = #tpu.pipeline_mode<synchronous>, transform_indices = @transform_1, window_bounds = array<i64: 8, 72>}, {transform_indices = @transform_2, window_bounds = array<i64: 3, 128>}, {transform_indices = @transform_3, window_bounds = array<i64: 1, 128>}, {transform_indices = @transform_4, window_bounds = array<i64: 1, 8, 128>}, {transform_indices = @transform_5, window_bounds = array<i64: 1, 1, 8, 1>}, {transform_indices = @transform_6, window_bounds = array<i64: 1, 1, 8, 1>}]} {
    %c128_i32 = arith.constant 128 : i32
    %0 = arith.muli %arg1, %c128_i32 : i32
    %1 = tpu.assume_multiple %0, 128 : i32
    %c0 = arith.constant 0 : index
    %c0_0 = arith.constant 0 : index
    %2 = arith.index_cast %1 : i32 to index
    %3 = vector.load %arg2[%c0, %c0_0, %2] : memref<1x8x290xf32, #tpu.memory_space<vmem>>, vector<1x8x162xf32>
    %4 = vector.shape_cast %3 : vector<1x8x162xf32> to vector<8x162xf32>
    %c0_1 = arith.constant 0 : index
    %c0_2 = arith.constant 0 : index
    %5 = vector.load %arg4[%c0_1, %c0_2] : memref<3x128xf32, #tpu.memory_space<vmem>>, vector<3x128xf32>
    %6 = vector.extract_strided_slice %4 {offsets = [0, 0], sizes = [8, 128], strides = [1, 1]} : vector<8x162xf32> to vector<8x128xf32>
    %7 = vector.extract_strided_slice %5 {offsets = [0, 0], sizes = [1, 128], strides = [1, 1]} : vector<3x128xf32> to vector<1x128xf32>
    %8 = vector.broadcast %7 : vector<1x128xf32> to vector<8x128xf32>
    %9 = arith.mulf %6, %8 : vector<8x128xf32>
    %10 = vector.extract_strided_slice %4 {offsets = [0, 1], sizes = [8, 128], strides = [1, 1]} : vector<8x162xf32> to vector<8x128xf32>
    %11 = vector.extract_strided_slice %5 {offsets = [1, 0], sizes = [1, 128], strides = [1, 1]} : vector<3x128xf32> to vector<1x128xf32>
    %12 = vector.broadcast %11 : vector<1x128xf32> to vector<8x128xf32>
    %13 = arith.mulf %10, %12 : vector<8x128xf32>
    %14 = vector.extract_strided_slice %4 {offsets = [0, 2], sizes = [8, 128], strides = [1, 1]} : vector<8x162xf32> to vector<8x128xf32>
    %15 = vector.extract_strided_slice %5 {offsets = [2, 0], sizes = [1, 128], strides = [1, 1]} : vector<3x128xf32> to vector<1x128xf32>
    %16 = vector.broadcast %15 : vector<1x128xf32> to vector<8x128xf32>
    %17 = arith.mulf %14, %16 : vector<8x128xf32>
    %18 = vector.extract_strided_slice %4 {offsets = [0, 16], sizes = [8, 128], strides = [1, 1]} : vector<8x162xf32> to vector<8x128xf32>
    %19 = vector.extract_strided_slice %5 {offsets = [0, 0], sizes = [1, 128], strides = [1, 1]} : vector<3x128xf32> to vector<1x128xf32>
    %20 = vector.broadcast %19 : vector<1x128xf32> to vector<8x128xf32>
    %21 = arith.mulf %18, %20 : vector<8x128xf32>
    %22 = vector.extract_strided_slice %4 {offsets = [0, 17], sizes = [8, 128], strides = [1, 1]} : vector<8x162xf32> to vector<8x128xf32>
    %23 = vector.extract_strided_slice %5 {offsets = [1, 0], sizes = [1, 128], strides = [1, 1]} : vector<3x128xf32> to vector<1x128xf32>
    %24 = vector.broadcast %23 : vector<1x128xf32> to vector<8x128xf32>
    %25 = arith.mulf %22, %24 : vector<8x128xf32>
    %26 = vector.extract_strided_slice %4 {offsets = [0, 18], sizes = [8, 128], strides = [1, 1]} : vector<8x162xf32> to vector<8x128xf32>
    %27 = vector.extract_strided_slice %5 {offsets = [2, 0], sizes = [1, 128], strides = [1, 1]} : vector<3x128xf32> to vector<1x128xf32>
    %28 = vector.broadcast %27 : vector<1x128xf32> to vector<8x128xf32>
    %29 = arith.mulf %26, %28 : vector<8x128xf32>
    %30 = vector.extract_strided_slice %4 {offsets = [0, 32], sizes = [8, 128], strides = [1, 1]} : vector<8x162xf32> to vector<8x128xf32>
    %31 = vector.extract_strided_slice %5 {offsets = [0, 0], sizes = [1, 128], strides = [1, 1]} : vector<3x128xf32> to vector<1x128xf32>
    %32 = vector.broadcast %31 : vector<1x128xf32> to vector<8x128xf32>
    %33 = arith.mulf %30, %32 : vector<8x128xf32>
    %34 = vector.extract_strided_slice %4 {offsets = [0, 33], sizes = [8, 128], strides = [1, 1]} : vector<8x162xf32> to vector<8x128xf32>
    %35 = vector.extract_strided_slice %5 {offsets = [1, 0], sizes = [1, 128], strides = [1, 1]} : vector<3x128xf32> to vector<1x128xf32>
    %36 = vector.broadcast %35 : vector<1x128xf32> to vector<8x128xf32>
    %37 = arith.mulf %34, %36 : vector<8x128xf32>
    %38 = vector.extract_strided_slice %4 {offsets = [0, 34], sizes = [8, 128], strides = [1, 1]} : vector<8x162xf32> to vector<8x128xf32>
    %39 = vector.extract_strided_slice %5 {offsets = [2, 0], sizes = [1, 128], strides = [1, 1]} : vector<3x128xf32> to vector<1x128xf32>
    %40 = vector.broadcast %39 : vector<1x128xf32> to vector<8x128xf32>
    %41 = arith.mulf %38, %40 : vector<8x128xf32>
    %42 = tpu.concatenate %9, %13, %17, %21, %25, %29, %33, %37, %41 in 0 : vector<8x128xf32>, vector<8x128xf32>, vector<8x128xf32>, vector<8x128xf32>, vector<8x128xf32>, vector<8x128xf32>, vector<8x128xf32>, vector<8x128xf32>, vector<8x128xf32> -> vector<72x128xf32>
    %c0_3 = arith.constant 0 : index
    %c0_4 = arith.constant 0 : index
    %43 = vector.load %arg3[%c0_3, %c0_4] : memref<8x72xf32, #tpu.memory_space<vmem>>, vector<8x72xf32>
    %cst = arith.constant dense<0.000000e+00> : vector<8x128xf32>
    %44 = tpu.matmul %43, %42, %cst {dimension_numbers = #tpu.dot_dimension_numbers<[1], [0], [0], [1], [0, 0, 1, 1], [], []>} : vector<8x72xf32>, vector<72x128xf32>, vector<8x128xf32> -> vector<8x128xf32>
    %c0_5 = arith.constant 0 : index
    %c0_6 = arith.constant 0 : index
    %c0_7 = arith.constant 0 : index
    %45 = vector.load %arg6[%c0_5, %c0_6, %c0_7] : memref<1x8x128xf32, #tpu.memory_space<vmem>>, vector<1x8x128xf32>
    %46 = vector.shape_cast %45 : vector<1x8x128xf32> to vector<8x128xf32>
    %47 = vector.shape_cast %44 : vector<8x128xf32> to vector<1x8x128xf32>
    tpu.vector_store %arg6[%c0_5, %c0_6, %c0_7], %47 {strides = array<i32>} : memref<1x8x128xf32, #tpu.memory_space<vmem>>, vector<1x8x128xf32>,
    %c0_8 = arith.constant 0 : index
    %c0_9 = arith.constant 0 : index
    %48 = vector.load %arg5[%c0_8, %c0_9] : memref<1x128xf32, #tpu.memory_space<vmem>>, vector<1x128xf32>
    %49 = vector.broadcast %48 : vector<1x128xf32> to vector<8x128xf32>
    %50 = arith.mulf %44, %49 : vector<8x128xf32>
    %cst_10 = arith.constant dense<0.000000e+00> : vector<8xf32>
    %51 = vector.multi_reduction <add>, %50, %cst_10 [1] : vector<8x128xf32> to vector<8xf32>
    %52 = vector.shape_cast %51 : vector<8xf32> to vector<8x1xf32>
    %c0_11 = arith.constant 0 : index
    %c0_12 = arith.constant 0 : index
    %c0_13 = arith.constant 0 : index
    %c0_14 = arith.constant 0 : index
    %53 = vector.load %arg7[%c0_11, %c0_12, %c0_13, %c0_14] : memref<1x1x8x1xf32, #tpu.memory_space<vmem>>, vector<1x1x8x1xf32>
    %54 = vector.shape_cast %53 : vector<1x1x8x1xf32> to vector<8x1xf32>
    %55 = vector.shape_cast %52 : vector<8x1xf32> to vector<1x1x8x1xf32>
    tpu.vector_store %arg7[%c0_11, %c0_12, %c0_13, %c0_14], %55 {strides = array<i32>} : memref<1x1x8x1xf32, #tpu.memory_space<vmem>>, vector<1x1x8x1xf32>,
    %56 = arith.mulf %50, %44 : vector<8x128xf32>
    %cst_15 = arith.constant dense<0.000000e+00> : vector<8xf32>
    %57 = vector.multi_reduction <add>, %56, %cst_15 [1] : vector<8x128xf32> to vector<8xf32>
    %58 = vector.shape_cast %57 : vector<8xf32> to vector<8x1xf32>
    %c0_16 = arith.constant 0 : index
    %c0_17 = arith.constant 0 : index
    %c0_18 = arith.constant 0 : index
    %c0_19 = arith.constant 0 : index
    %59 = vector.load %arg8[%c0_16, %c0_17, %c0_18, %c0_19] : memref<1x1x8x1xf32, #tpu.memory_space<vmem>>, vector<1x1x8x1xf32>
    %60 = vector.shape_cast %59 : vector<1x1x8x1xf32> to vector<8x1xf32>
    %61 = vector.shape_cast %58 : vector<8x1xf32> to vector<1x1x8x1xf32>
    tpu.vector_store %arg8[%c0_16, %c0_17, %c0_18, %c0_19], %61 {strides = array<i32>} : memref<1x1x8x1xf32, #tpu.memory_space<vmem>>, vector<1x1x8x1xf32>,
    return
  }
  func.func @transform_0(%arg0: i32, %arg1: i32) -> (i32, i32, i32) {
    %c0_i32 = arith.constant 0 : i32
    %c0_i32_0 = arith.constant 0 : i32
    %c0_i32_1 = arith.constant 0 : i32
    return %arg0, %c0_i32, %c0_i32_0 : i32, i32, i32
  }
  func.func @transform_1(%arg0: i32, %arg1: i32) -> (i32, i32) {
    %c0_i32 = arith.constant 0 : i32
    %c0_i32_0 = arith.constant 0 : i32
    %c0_i32_1 = arith.constant 0 : i32
    return %c0_i32, %c0_i32_0 : i32, i32
  }
  func.func @transform_2(%arg0: i32, %arg1: i32) -> (i32, i32) {
    %c0_i32 = arith.constant 0 : i32
    %c0_i32_0 = arith.constant 0 : i32
    return %c0_i32, %arg1 : i32, i32
  }
  func.func @transform_3(%arg0: i32, %arg1: i32) -> (i32, i32) {
    %c0_i32 = arith.constant 0 : i32
    %c0_i32_0 = arith.constant 0 : i32
    return %c0_i32, %arg1 : i32, i32
  }
  func.func @transform_4(%arg0: i32, %arg1: i32) -> (i32, i32, i32) {
    %c0_i32 = arith.constant 0 : i32
    %c0_i32_0 = arith.constant 0 : i32
    return %arg0, %c0_i32, %arg1 : i32, i32, i32
  }
  func.func @transform_5(%arg0: i32, %arg1: i32) -> (i32, i32, i32, i32) {
    %c0_i32 = arith.constant 0 : i32
    %c0_i32_0 = arith.constant 0 : i32
    %c0_i32_1 = arith.constant 0 : i32
    return %arg0, %arg1, %c0_i32, %c0_i32_0 : i32, i32, i32, i32
  }
  func.func @transform_6(%arg0: i32, %arg1: i32) -> (i32, i32, i32, i32) {
    %c0_i32 = arith.constant 0 : i32
    %c0_i32_0 = arith.constant 0 : i32
    %c0_i32_1 = arith.constant 0 : i32
    return %arg0, %arg1, %c0_i32, %c0_i32_0 : i32, i32, i32, i32
  }
}

</mosaic_0001>

<llo_original>
// kernel: conv2d_batchnorm.3
$region0: #{conv2d_batchnorm.3}
  #allocation0 [shape = 'u32[]', space=smem, size = 0x4, offset = 0x4, fixed_abs, tag = 'smem constant byte address 0x4 - core index']
  #allocation1 [shape = 'u32[144,128]{1,0:T(1,128)}', space=vmem, size = 0x12000, scoped, tag = 'internal scratch']
  %s0 = inlined_call_operand.vmem [shape: f32[2,8,256], index: 0, kind: input, shape index: {}, may-alias: {0,3}]
  %s1 = inlined_call_operand.vmem [shape: f32[1,8,1], index: 1, kind: input, shape index: {}]
  %s2 = inlined_call_operand.vmem [shape: f32[1,8,1], index: 2, kind: input, shape index: {}]
  %s3 = inlined_call_operand.vmem [shape: f32[2,8,256], index: 3, kind: output, shape index: {}, may-alias: {0,3}]
  %s4 = sld [smem:[#allocation0]]
  $region45: #{conv2d_batchnorm.3} parent=0
    _
  %s6 = ssub.s32 1, %s4
  %s7 = scalar_select 0, %s6, %s4
  loop: start=0, step=1, limit=6
  $region2: #{conv2d_batchnorm.3} parent=0 // loop_pre_header
    _
  $region3: #{conv2d_batchnorm.3} parent=0 // loop_header
    %s9 = sphi 0, %s13
    %p10 = scmp.ge.s32.totalorder %s9, 6
    %s16 = sphi 0, %s28
    %s17 = sphi 0, %s24
    %s18 = sphi 0, %s16
    %s19 = sphi 0, %s17
    %s20 = sphi 0, %s18
    %s21 = sphi 0, %s19
    %s33 = sphi 0, %s35
    %s36 = sphi 0, %s33
    %s37 = sphi 0, %s36
    %s53 = sphi 0, %s37
    %s57 = sphi 0, %s57
    %s59 = sphi 0, %s57
    %s60 = sphi 0, %s59
    %s74 = sphi 0, %s60
    %s78 = sphi 0, %s78
    %s80 = sphi 0, %s78
    %s81 = sphi 0, %s80
    %s95 = sphi 0, %s81
    %s103 = sphi 0, %s105
    %s106 = sphi 0, %s103
    %s107 = sphi 0, %s106
    %s123 = sphi 0, %s107
  $region4: #{conv2d_batchnorm.3} parent=0 // loop_header_branch
    %12 = sbr.rel (%p10) target = $region8
  $region5: #{conv2d_batchnorm.3} parent=0 // loop_body
    %s14 = ssub.s32 %s9, 1
    %s15 = ssub.s32 %s9, 2
    %s22 = sadd.s32 1, %s17
    %p23 = scmp.ge.s32.totalorder %s22, 2
    %s24 = scalar_select %p23, 0, %s22
    %s25 = sadd.s32 1, %s16
    %s26 = scalar_select %p23, %s25, %s16
    %p27 = scmp.ge.s32.totalorder %s26, 2
    %s28 = scalar_select %p27, 0, %s26
    %s29 = ssub.s32 %s16, %s28
    %s30 = ssub.s32 %s17, %s24
    %s31 = sor.u32 %s29, %s30
    %p32 = scmp.eq.s32.totalorder %s31, 0
    %s34 = sadd.s32 %s33, 1
    %s35 = scalar_select %p32, %s33, %s34
    %p38 = pneg %p32
    %p39 = scmp.eq.s32.totalorder %s9, 3
    %p40 = por %p38, %p39
    %p41 = scmp.ne.s32.totalorder %s33, %s36
    %p42 = scmp.eq.s32.totalorder %s9, 0
    %p43 = por %p41, %p42
    %p44 = scmp.ne.s32.totalorder %s33, %s36
    %p45 = scmp.eq.s32.totalorder %s14, 3
    %p46 = por %p44, %p45
    %p47 = scmp.ne.s32.totalorder %s36, %s37
    %p48 = scmp.eq.s32.totalorder %s14, 0
    %p49 = por %p47, %p48
    %p50 = scmp.ne.s32.totalorder %s36, %s37
    %p51 = scmp.eq.s32.totalorder %s15, 3
    %p52 = por %p50, %p51
    %p54 = scmp.ne.s32.totalorder %s37, %s53
    %p55 = scmp.eq.s32.totalorder %s15, 0
    %p56 = por %p54, %p55
    %s58 = sadd.s32 %s57, 1
    %p61 = scmp.eq.s32.totalorder %s9, 3
    %p62 = scmp.ne.s32.totalorder %s57, %s59
    %p63 = scmp.eq.s32.totalorder %s9, 0
    %p64 = por %p62, %p63
    %p65 = scmp.ne.s32.totalorder %s57, %s59
    %p66 = scmp.eq.s32.totalorder %s14, 3
    %p67 = por %p65, %p66
    %p68 = scmp.ne.s32.totalorder %s59, %s60
    %p69 = scmp.eq.s32.totalorder %s14, 0
    %p70 = por %p68, %p69
    %p71 = scmp.ne.s32.totalorder %s59, %s60
    %p72 = scmp.eq.s32.totalorder %s15, 3
    %p73 = por %p71, %p72
    %p75 = scmp.ne.s32.totalorder %s60, %s74
    %p76 = scmp.eq.s32.totalorder %s15, 0
    %p77 = por %p75, %p76
    %s79 = sadd.s32 %s78, 1
    %p82 = scmp.eq.s32.totalorder %s9, 3
    %p83 = scmp.ne.s32.totalorder %s78, %s80
    %p84 = scmp.eq.s32.totalorder %s9, 0
    %p85 = por %p83, %p84
    %p86 = scmp.ne.s32.totalorder %s78, %s80
    %p87 = scmp.eq.s32.totalorder %s14, 3
    %p88 = por %p86, %p87
    %p89 = scmp.ne.s32.totalorder %s80, %s81
    %p90 = scmp.eq.s32.totalorder %s14, 0
    %p91 = por %p89, %p90
    %p92 = scmp.ne.s32.totalorder %s80, %s81
    %p93 = scmp.eq.s32.totalorder %s15, 3
    %p94 = por %p92, %p93
    %p96 = scmp.ne.s32.totalorder %s81, %s95
    %p97 = scmp.eq.s32.totalorder %s15, 0
    %p98 = por %p96, %p97
    %s99 = ssub.s32 %s16, %s28
    %s100 = ssub.s32 %s17, %s24
    %s101 = sor.u32 %s99, %s100
    %p102 = scmp.eq.s32.totalorder %s101, 0
    %s104 = sadd.s32 %s103, 1
    %s105 = scalar_select %p102, %s103, %s104
    %p108 = pneg %p102
    %p109 = scmp.eq.s32.totalorder %s9, 3
    %p110 = por %p108, %p109
    %p111 = scmp.ne.s32.totalorder %s103, %s106
    %p112 = scmp.eq.s32.totalorder %s9, 0
    %p113 = por %p111, %p112
    %p114 = scmp.ne.s32.totalorder %s103, %s106
    %p115 = scmp.eq.s32.totalorder %s14, 3
    %p116 = por %p114, %p115
    %p117 = scmp.ne.s32.totalorder %s106, %s107
    %p118 = scmp.eq.s32.totalorder %s14, 0
    %p119 = por %p117, %p118
    %p120 = scmp.ne.s32.totalorder %s106, %s107
    %p121 = scmp.eq.s32.totalorder %s15, 3
    %p122 = por %p120, %p121
    %p124 = scmp.ne.s32.totalorder %s107, %s123
    %p125 = scmp.eq.s32.totalorder %s15, 0
    %p126 = por %p124, %p125
    %p127 = scmp.le.s32.totalorder 1, %s9
    %p128 = scmp.lt.s32.totalorder %s9, 5
    %p129 = pnand %p127, %p128
    %p130 = pneg %p129
    // Predicated region
    $region9: #{conv2d_batchnorm.3} parent=5 // pred_check
      _
    $region10: #{conv2d_batchnorm.3} parent=5 // pred_check_branch
      %132 = sbr.rel (%p129) target = $region12
    $region11: #{conv2d_batchnorm.3} parent=5 // pred_region
      %s133 = ssub.s32 %s9, 1
      // Predicated region
      $region13: #{conv2d_batchnorm.3} parent=11 // pred_check
        %p134 = pneg %p70
      $region14: #{conv2d_batchnorm.3} parent=11 // pred_check_branch
        %136 = sbr.rel (%p134) target = $region16
      $region15: #{conv2d_batchnorm.3} parent=11 // pred_region
        _
      $region16: #{conv2d_batchnorm.3} parent=11 // pred_fallthru
        _
      // Predicated region
      $region17: #{conv2d_batchnorm.3} parent=11 // pred_check
        %p137 = pneg %p91
      $region18: #{conv2d_batchnorm.3} parent=11 // pred_check_branch
        %139 = sbr.rel (%p137) target = $region20
      $region19: #{conv2d_batchnorm.3} parent=11 // pred_region
        _
      $region20: #{conv2d_batchnorm.3} parent=11 // pred_fallthru
        _
    $region12: #{conv2d_batchnorm.3} parent=5 // pred_fallthru
      _
    %p140 = scmp.lt.s32.totalorder %s9, 4
    // Predicated region
    $region21: #{conv2d_batchnorm.3} parent=5 // pred_check
      %p141 = pneg %p140
    $region22: #{conv2d_batchnorm.3} parent=5 // pred_check_branch
      %143 = sbr.rel (%p141) target = $region24
    $region23: #{conv2d_batchnorm.3} parent=5 // pred_region
      // Predicated region
      $region25: #{conv2d_batchnorm.3} parent=23 // pred_check
        %p144 = pneg %p43
      $region26: #{conv2d_batchnorm.3} parent=23 // pred_check_branch
        %146 = sbr.rel (%p144) target = $region28
      $region27: #{conv2d_batchnorm.3} parent=23 // pred_region
        %p147 = scmp.lt.s32.totalorder %s16, 1
        %s148 = scalar_select %p147, %s16, 1
        %p149 = scmp.lt.s32.totalorder %s17, 1
        %s150 = scalar_select %p149, %s17, 1
        %s151 = smul.addr %s148, 2
        %s152 = sadd.s32 %s150, %s151
        %s153 = smul.addr %s152, 8
        %s154 = scalar_lea.vmem %s0, %s153
      $region28: #{conv2d_batchnorm.3} parent=23 // pred_fallthru
        _
    $region24: #{conv2d_batchnorm.3} parent=5 // pred_fallthru
      _
    %p155 = scmp.le.s32.totalorder 1, %s9
    %p156 = scmp.lt.s32.totalorder %s9, 5
    %p157 = pnand %p155, %p156
    %p158 = pneg %p157
    // Predicated region
    $region29: #{conv2d_batchnorm.3} parent=5 // pred_check
      _
    $region30: #{conv2d_batchnorm.3} parent=5 // pred_check_branch
      %160 = sbr.rel (%p157) target = $region32
    $region31: #{conv2d_batchnorm.3} parent=5 // pred_region
      %s161 = ssub.s32 %s9, 1
      %p162 = scmp.lt.s32.totalorder %s18, 1
      %s163 = scalar_select %p162, %s18, 1
      %p164 = scmp.lt.s32.totalorder %s19, 1
      %s165 = scalar_select %p164, %s19, 1
      %s166 = smul.addr %s163, 2
      %s167 = sadd.s32 %s165, %s166
      %s168 = smul.addr %s167, 8
      %s169 = scalar_lea.vmem %s0, %s168
      %p170 = pneg %p49
      %p171 = pneg %p46
      %p172 = pneg %p70
      %p173 = pneg %p67
      %p174 = pneg %p91
      %p175 = pneg %p88
      %p176 = pneg %p119
      %p177 = pneg %p116
      %p178 = scmp.lt.s32.totalorder %s18, 1
      %s179 = scalar_select %p178, %s18, 1
      %p180 = scmp.lt.s32.totalorder %s19, 1
      %s181 = scalar_select %p180, %s19, 1
      %s182 = smul.addr %s179, 2
      %s183 = sadd.s32 %s181, %s182
      %s184 = smul.addr %s183, 8
      %s185 = scalar_lea.vmem %s3, %s184
      %p186 = scmp.lt.s32.totalorder %s18, 1
      %s187 = scalar_select %p186, %s18, 1
      %p188 = scmp.lt.s32.totalorder %s19, 1
      %s189 = scalar_select %p188, %s19, 1
      %s190 = smul.addr %s187, 2
      %s191 = sadd.s32 %s189, %s190
      %s192 = smul.addr %s191, 8
      %s193 = scalar_lea.vmem %s0, %s192
      %p194 = scmp.lt.s32.totalorder %s18, 1
      %s195 = scalar_select %p194, %s18, 1
      %p196 = scmp.lt.s32.totalorder %s19, 1
      %s197 = scalar_select %p196, %s19, 1
      %s198 = smul.addr %s195, 2
      %s199 = sadd.s32 %s197, %s198
      %s200 = smul.addr %s199, 8
      %s201 = scalar_lea.vmem %s3, %s200
      %v202 = vld [vmem:[%s193] sm:$0xff]
      %v203 = vld [vmem:[%s1] sm:$0xff]
      %205 = vset.pattern.permute.xlu0 0
      %206 = vperm.xlu0 %205, %v203
      %v207 = vpop.permute.xlu0 %206
      %v209 = vmul.f32 %v202, %v207
      %v210 = vld [vmem:[%s2] sm:$0xff]
      %212 = vset.pattern.permute.xlu0 0
      %213 = vperm.xlu0 %212, %v210
      %v214 = vpop.permute.xlu0 %213
      %v216 = vadd.f32 %v209, %v214
      %217 = vst [vmem:[%s201] sm:$0xff] %v216
      %p218 = scmp.lt.s32.totalorder %s18, 1
      %s219 = scalar_select %p218, %s18, 1
      %p220 = scmp.lt.s32.totalorder %s19, 1
      %s221 = scalar_select %p220, %s19, 1
      %s222 = smul.addr %s219, 2
      %s223 = sadd.s32 %s221, %s222
      %s224 = smul.addr %s223, 8
      %s225 = scalar_lea.vmem %s3, %s224
      // Predicated region
      $region33: #{conv2d_batchnorm.3} parent=31 // pred_check
        %p226 = pneg %p116
      $region34: #{conv2d_batchnorm.3} parent=31 // pred_check_branch
        %228 = sbr.rel (%p226) target = $region36
      $region35: #{conv2d_batchnorm.3} parent=31 // pred_region
        _
      $region36: #{conv2d_batchnorm.3} parent=31 // pred_fallthru
        _
    $region32: #{conv2d_batchnorm.3} parent=5 // pred_fallthru
      _
    %p229 = scmp.le.s32.totalorder 2, %s9
    // Predicated region
    $region37: #{conv2d_batchnorm.3} parent=5 // pred_check
      %p230 = pneg %p229
    $region38: #{conv2d_batchnorm.3} parent=5 // pred_check_branch
      %232 = sbr.rel (%p230) target = $region40
    $region39: #{conv2d_batchnorm.3} parent=5 // pred_region
      %s233 = ssub.s32 %s9, 2
      // Predicated region
      $region41: #{conv2d_batchnorm.3} parent=39 // pred_check
        %p234 = pneg %p122
      $region42: #{conv2d_batchnorm.3} parent=39 // pred_check_branch
        %236 = sbr.rel (%p234) target = $region44
      $region43: #{conv2d_batchnorm.3} parent=39 // pred_region
        %p237 = scmp.lt.s32.totalorder %s20, 1
        %s238 = scalar_select %p237, %s20, 1
        %p239 = scmp.lt.s32.totalorder %s21, 1
        %s240 = scalar_select %p239, %s21, 1
        %s241 = smul.addr %s238, 2
        %s242 = sadd.s32 %s240, %s241
        %s243 = smul.addr %s242, 8
        %s244 = scalar_lea.vmem %s3, %s243
      $region44: #{conv2d_batchnorm.3} parent=39 // pred_fallthru
        _
    $region40: #{conv2d_batchnorm.3} parent=5 // pred_fallthru
      _
  $region6: #{conv2d_batchnorm.3} parent=0 // loop_footer
    %s13 = sadd.s32 1, %s9
  $region7: #{conv2d_batchnorm.3} parent=0 // loop_footer_branch
    %8 = sbr.rel target = $region3
  $region8: #{conv2d_batchnorm.3} parent=0 // loop_exit
    _

// kernel: conv2d_batchnorm.2
$region0: #{conv2d_batchnorm.2}
  #allocation0 [shape = 'u32[]', space=smem, size = 0x4, offset = 0x4, fixed_abs, tag = 'smem constant byte address 0x4 - core index']
  #allocation1 [shape = 'u32[144,128]{1,0:T(1,128)}', space=vmem, size = 0x12000, scoped, tag = 'internal scratch']
  %s0 = inlined_call_operand.vmem [shape: f32[2,8,290], index: 0, kind: input, shape index: {}]
  %s1 = inlined_call_operand.vmem [shape: f32[8,72], index: 1, kind: input, shape index: {}]
  %s2 = inlined_call_operand.vmem [shape: f32[3,256], index: 2, kind: input, shape index: {}]
  %s3 = inlined_call_operand.vmem [shape: f32[1,256], index: 3, kind: input, shape index: {}]
  %s4 = inlined_call_operand.vmem [shape: f32[2,8,256], index: 4, kind: output, shape index: {0}]
  %s5 = inlined_call_operand.vmem [shape: f32[2,2,8,1], index: 5, kind: output, shape index: {1}]
  %s6 = inlined_call_operand.vmem [shape: f32[2,2,8,1], index: 6, kind: output, shape index: {2}]
  %7 = xla_tuple %s4, %s5, %s6
  %s8 = sld [smem:[#allocation0]]
  $region65: #{conv2d_batchnorm.2} parent=0
    _
  %s10 = ssub.s32 1, %s8
  %s11 = scalar_select 0, %s10, %s8
  loop: start=0, step=1, limit=6
  $region2: #{conv2d_batchnorm.2} parent=0 // loop_pre_header
    _
  $region3: #{conv2d_batchnorm.2} parent=0 // loop_header
    %s13 = sphi 0, %s17
    %p14 = scmp.ge.s32.totalorder %s13, 6
    %s20 = sphi 0, %s32
    %s21 = sphi 0, %s28
    %s22 = sphi 0, %s20
    %s23 = sphi 0, %s21
    %s24 = sphi 0, %s22
    %s25 = sphi 0, %s23
    %s35 = sphi 0, %s37
    %s38 = sphi 0, %s35
    %s39 = sphi 0, %s38
    %s55 = sphi 0, %s39
    %s59 = sphi 0, %s59
    %s61 = sphi 0, %s59
    %s62 = sphi 0, %s61
    %s76 = sphi 0, %s62
    %s82 = sphi 0, %s84
    %s85 = sphi 0, %s82
    %s86 = sphi 0, %s85
    %s102 = sphi 0, %s86
    %s108 = sphi 0, %s110
    %s111 = sphi 0, %s108
    %s112 = sphi 0, %s111
    %s128 = sphi 0, %s112
    %s136 = sphi 0, %s138
    %s139 = sphi 0, %s136
    %s140 = sphi 0, %s139
    %s156 = sphi 0, %s140
    %s164 = sphi 0, %s166
    %s167 = sphi 0, %s164
    %s168 = sphi 0, %s167
    %s184 = sphi 0, %s168
    %s192 = sphi 0, %s194
    %s195 = sphi 0, %s192
    %s196 = sphi 0, %s195
    %s212 = sphi 0, %s196
  $region4: #{conv2d_batchnorm.2} parent=0 // loop_header_branch
    %16 = sbr.rel (%p14) target = $region8
  $region5: #{conv2d_batchnorm.2} parent=0 // loop_body
    %s18 = ssub.s32 %s13, 1
    %s19 = ssub.s32 %s13, 2
    %s26 = sadd.s32 1, %s21
    %p27 = scmp.ge.s32.totalorder %s26, 2
    %s28 = scalar_select %p27, 0, %s26
    %s29 = sadd.s32 1, %s20
    %s30 = scalar_select %p27, %s29, %s20
    %p31 = scmp.ge.s32.totalorder %s30, 2
    %s32 = scalar_select %p31, 0, %s30
    %s33 = ssub.s32 %s20, %s32
    %p34 = scmp.eq.s32.totalorder %s33, 0
    %s36 = sadd.s32 %s35, 1
    %s37 = scalar_select %p34, %s35, %s36
    %p40 = pneg %p34
    %p41 = scmp.eq.s32.totalorder %s13, 3
    %p42 = por %p40, %p41
    %p43 = scmp.ne.s32.totalorder %s35, %s38
    %p44 = scmp.eq.s32.totalorder %s13, 0
    %p45 = por %p43, %p44
    %p46 = scmp.ne.s32.totalorder %s35, %s38
    %p47 = scmp.eq.s32.totalorder %s18, 3
    %p48 = por %p46, %p47
    %p49 = scmp.ne.s32.totalorder %s38, %s39
    %p50 = scmp.eq.s32.totalorder %s18, 0
    %p51 = por %p49, %p50
    %p52 = scmp.ne.s32.totalorder %s38, %s39
    %p53 = scmp.eq.s32.totalorder %s19, 3
    %p54 = por %p52, %p53
    %p56 = scmp.ne.s32.totalorder %s39, %s55
    %p57 = scmp.eq.s32.totalorder %s19, 0
    %p58 = por %p56, %p57
    %s60 = sadd.s32 %s59, 1
    %p63 = scmp.eq.s32.totalorder %s13, 3
    %p64 = scmp.ne.s32.totalorder %s59, %s61
    %p65 = scmp.eq.s32.totalorder %s13, 0
    %p66 = por %p64, %p65
    %p67 = scmp.ne.s32.totalorder %s59, %s61
    %p68 = scmp.eq.s32.totalorder %s18, 3
    %p69 = por %p67, %p68
    %p70 = scmp.ne.s32.totalorder %s61, %s62
    %p71 = scmp.eq.s32.totalorder %s18, 0
    %p72 = por %p70, %p71
    %p73 = scmp.ne.s32.totalorder %s61, %s62
    %p74 = scmp.eq.s32.totalorder %s19, 3
    %p75 = por %p73, %p74
    %p77 = scmp.ne.s32.totalorder %s62, %s76
    %p78 = scmp.eq.s32.totalorder %s19, 0
    %p79 = por %p77, %p78
    %s80 = ssub.s32 %s21, %s28
    %p81 = scmp.eq.s32.totalorder %s80, 0
    %s83 = sadd.s32 %s82, 1
    %s84 = scalar_select %p81, %s82, %s83
    %p87 = pneg %p81
    %p88 = scmp.eq.s32.totalorder %s13, 3
    %p89 = por %p87, %p88
    %p90 = scmp.ne.s32.totalorder %s82, %s85
    %p91 = scmp.eq.s32.totalorder %s13, 0
    %p92 = por %p90, %p91
    %p93 = scmp.ne.s32.totalorder %s82, %s85
    %p94 = scmp.eq.s32.totalorder %s18, 3
    %p95 = por %p93, %p94
    %p96 = scmp.ne.s32.totalorder %s85, %s86
    %p97 = scmp.eq.s32.totalorder %s18, 0
    %p98 = por %p96, %p97
    %p99 = scmp.ne.s32.totalorder %s85, %s86
    %p100 = scmp.eq.s32.totalorder %s19, 3
    %p101 = por %p99, %p100
    %p103 = scmp.ne.s32.totalorder %s86, %s102
    %p104 = scmp.eq.s32.totalorder %s19, 0
    %p105 = por %p103, %p104
    %s106 = ssub.s32 %s21, %s28
    %p107 = scmp.eq.s32.totalorder %s106, 0
    %s109 = sadd.s32 %s108, 1
    %s110 = scalar_select %p107, %s108, %s109
    %p113 = pneg %p107
    %p114 = scmp.eq.s32.totalorder %s13, 3
    %p115 = por %p113, %p114
    %p116 = scmp.ne.s32.totalorder %s108, %s111
    %p117 = scmp.eq.s32.totalorder %s13, 0
    %p118 = por %p116, %p117
    %p119 = scmp.ne.s32.totalorder %s108, %s111
    %p120 = scmp.eq.s32.totalorder %s18, 3
    %p121 = por %p119, %p120
    %p122 = scmp.ne.s32.totalorder %s111, %s112
    %p123 = scmp.eq.s32.totalorder %s18, 0
    %p124 = por %p122, %p123
    %p125 = scmp.ne.s32.totalorder %s111, %s112
    %p126 = scmp.eq.s32.totalorder %s19, 3
    %p127 = por %p125, %p126
    %p129 = scmp.ne.s32.totalorder %s112, %s128
    %p130 = scmp.eq.s32.totalorder %s19, 0
    %p131 = por %p129, %p130
    %s132 = ssub.s32 %s20, %s32
    %s133 = ssub.s32 %s21, %s28
    %s134 = sor.u32 %s132, %s133
    %p135 = scmp.eq.s32.totalorder %s134, 0
    %s137 = sadd.s32 %s136, 1
    %s138 = scalar_select %p135, %s136, %s137
    %p141 = pneg %p135
    %p142 = scmp.eq.s32.totalorder %s13, 3
    %p143 = por %p141, %p142
    %p144 = scmp.ne.s32.totalorder %s136, %s139
    %p145 = scmp.eq.s32.totalorder %s13, 0
    %p146 = por %p144, %p145
    %p147 = scmp.ne.s32.totalorder %s136, %s139
    %p148 = scmp.eq.s32.totalorder %s18, 3
    %p149 = por %p147, %p148
    %p150 = scmp.ne.s32.totalorder %s139, %s140
    %p151 = scmp.eq.s32.totalorder %s18, 0
    %p152 = por %p150, %p151
    %p153 = scmp.ne.s32.totalorder %s139, %s140
    %p154 = scmp.eq.s32.totalorder %s19, 3
    %p155 = por %p153, %p154
    %p157 = scmp.ne.s32.totalorder %s140, %s156
    %p158 = scmp.eq.s32.totalorder %s19, 0
    %p159 = por %p157, %p158
    %s160 = ssub.s32 %s20, %s32
    %s161 = ssub.s32 %s21, %s28
    %s162 = sor.u32 %s160, %s161
    %p163 = scmp.eq.s32.totalorder %s162, 0
    %s165 = sadd.s32 %s164, 1
    %s166 = scalar_select %p163, %s164, %s165
    %p169 = pneg %p163
    %p170 = scmp.eq.s32.totalorder %s13, 3
    %p171 = por %p169, %p170
    %p172 = scmp.ne.s32.totalorder %s164, %s167
    %p173 = scmp.eq.s32.totalorder %s13, 0
    %p174 = por %p172, %p173
    %p175 = scmp.ne.s32.totalorder %s164, %s167
    %p176 = scmp.eq.s32.totalorder %s18, 3
    %p177 = por %p175, %p176
    %p178 = scmp.ne.s32.totalorder %s167, %s168
    %p179 = scmp.eq.s32.totalorder %s18, 0
    %p180 = por %p178, %p179
    %p181 = scmp.ne.s32.totalorder %s167, %s168
    %p182 = scmp.eq.s32.totalorder %s19, 3
    %p183 = por %p181, %p182
    %p185 = scmp.ne.s32.totalorder %s168, %s184
    %p186 = scmp.eq.s32.totalorder %s19, 0
    %p187 = por %p185, %p186
    %s188 = ssub.s32 %s20, %s32
    %s189 = ssub.s32 %s21, %s28
    %s190 = sor.u32 %s188, %s189
    %p191 = scmp.eq.s32.totalorder %s190, 0
    %s193 = sadd.s32 %s192, 1
    %s194 = scalar_select %p191, %s192, %s193
    %p197 = pneg %p191
    %p198 = scmp.eq.s32.totalorder %s13, 3
    %p199 = por %p197, %p198
    %p200 = scmp.ne.s32.totalorder %s192, %s195
    %p201 = scmp.eq.s32.totalorder %s13, 0
    %p202 = por %p200, %p201
    %p203 = scmp.ne.s32.totalorder %s192, %s195
    %p204 = scmp.eq.s32.totalorder %s18, 3
    %p205 = por %p203, %p204
    %p206 = scmp.ne.s32.totalorder %s195, %s196
    %p207 = scmp.eq.s32.totalorder %s18, 0
    %p208 = por %p206, %p207
    %p209 = scmp.ne.s32.totalorder %s195, %s196
    %p210 = scmp.eq.s32.totalorder %s19, 3
    %p211 = por %p209, %p210
    %p213 = scmp.ne.s32.totalorder %s196, %s212
    %p214 = scmp.eq.s32.totalorder %s19, 0
    %p215 = por %p213, %p214
    %p216 = scmp.le.s32.totalorder 1, %s13
    %p217 = scmp.lt.s32.totalorder %s13, 5
    %p218 = pnand %p216, %p217
    %p219 = pneg %p218
    // Predicated region
    $region9: #{conv2d_batchnorm.2} parent=5 // pred_check
      _
    $region10: #{conv2d_batchnorm.2} parent=5 // pred_check_branch
      %221 = sbr.rel (%p218) target = $region12
    $region11: #{conv2d_batchnorm.2} parent=5 // pred_region
      %s222 = ssub.s32 %s13, 1
      // Predicated region
      $region13: #{conv2d_batchnorm.2} parent=11 // pred_check
        %p223 = pneg %p72
      $region14: #{conv2d_batchnorm.2} parent=11 // pred_check_branch
        %225 = sbr.rel (%p223) target = $region16
      $region15: #{conv2d_batchnorm.2} parent=11 // pred_region
        _
      $region16: #{conv2d_batchnorm.2} parent=11 // pred_fallthru
        _
    $region12: #{conv2d_batchnorm.2} parent=5 // pred_fallthru
      _
    %p226 = scmp.lt.s32.totalorder %s13, 4
    // Predicated region
    $region17: #{conv2d_batchnorm.2} parent=5 // pred_check
      %p227 = pneg %p226
    $region18: #{conv2d_batchnorm.2} parent=5 // pred_check_branch
      %229 = sbr.rel (%p227) target = $region20
    $region19: #{conv2d_batchnorm.2} parent=5 // pred_region
      // Predicated region
      $region21: #{conv2d_batchnorm.2} parent=19 // pred_check
        %p230 = pneg %p45
      $region22: #{conv2d_batchnorm.2} parent=19 // pred_check_branch
        %232 = sbr.rel (%p230) target = $region24
      $region23: #{conv2d_batchnorm.2} parent=19 // pred_region
        %p233 = scmp.lt.s32.totalorder %s20, 1
        %s234 = scalar_select %p233, %s20, 1
        %s235 = smul.addr %s234, 3
        %s236 = smul.addr %s235, 8
        %s237 = scalar_lea.vmem %s0, %s236
      $region24: #{conv2d_batchnorm.2} parent=19 // pred_fallthru
        _
      // Predicated region
      $region25: #{conv2d_batchnorm.2} parent=19 // pred_check
        %p238 = pneg %p92
      $region26: #{conv2d_batchnorm.2} parent=19 // pred_check_branch
        %240 = sbr.rel (%p238) target = $region28
      $region27: #{conv2d_batchnorm.2} parent=19 // pred_region
        %p241 = scmp.lt.s32.totalorder %s21, 1
        %s242 = scalar_select %p241, %s21, 1
        %s243 = smul.addr %s242, 4
        %s244 = scalar_lea.vmem %s2, %s243
      $region28: #{conv2d_batchnorm.2} parent=19 // pred_fallthru
        _
      // Predicated region
      $region29: #{conv2d_batchnorm.2} parent=19 // pred_check
        %p245 = pneg %p118
      $region30: #{conv2d_batchnorm.2} parent=19 // pred_check_branch
        %247 = sbr.rel (%p245) target = $region32
      $region31: #{conv2d_batchnorm.2} parent=19 // pred_region
        %p248 = scmp.lt.s32.totalorder %s21, 1
        %s249 = scalar_select %p248, %s21, 1
        %s250 = scalar_lea.vmem %s3, %s249
      $region32: #{conv2d_batchnorm.2} parent=19 // pred_fallthru
        _
    $region20: #{conv2d_batchnorm.2} parent=5 // pred_fallthru
      _
    %p251 = scmp.le.s32.totalorder 1, %s13
    %p252 = scmp.lt.s32.totalorder %s13, 5
    %p253 = pnand %p251, %p252
    %p254 = pneg %p253
    // Predicated region
    $region33: #{conv2d_batchnorm.2} parent=5 // pred_check
      _
    $region34: #{conv2d_batchnorm.2} parent=5 // pred_check_branch
      %256 = sbr.rel (%p253) target = $region36
    $region35: #{conv2d_batchnorm.2} parent=5 // pred_region
      %s257 = ssub.s32 %s13, 1
      %p258 = scmp.lt.s32.totalorder %s22, 1
      %s259 = scalar_select %p258, %s22, 1
      %s260 = smul.addr %s259, 3
      %s261 = smul.addr %s260, 8
      %s262 = scalar_lea.vmem %s0, %s261
      %p263 = pneg %p51
      %p264 = pneg %p48
      %p265 = pneg %p72
      %p266 = pneg %p69
      %p267 = scmp.lt.s32.totalorder %s23, 1
      %s268 = scalar_select %p267, %s23, 1
      %s269 = smul.addr %s268, 4
      %s270 = scalar_lea.vmem %s2, %s269
      %p271 = pneg %p98
      %p272 = pneg %p95
      %p273 = scmp.lt.s32.totalorder %s23, 1
      %s274 = scalar_select %p273, %s23, 1
      %s275 = scalar_lea.vmem %s3, %s274
      %p276 = pneg %p124
      %p277 = pneg %p121
      %p278 = pneg %p152
      %p279 = pneg %p149
      %p280 = scmp.lt.s32.totalorder %s22, 1
      %s281 = scalar_select %p280, %s22, 1
      %p282 = scmp.lt.s32.totalorder %s23, 1
      %s283 = scalar_select %p282, %s23, 1
      %s284 = smul.addr %s281, 2
      %s285 = sadd.s32 %s283, %s284
      %s286 = smul.addr %s285, 8
      %s287 = scalar_lea.vmem %s4, %s286
      %p288 = pneg %p180
      %p289 = pneg %p177
      %p290 = scmp.lt.s32.totalorder %s22, 1
      %s291 = scalar_select %p290, %s22, 1
      %p292 = scmp.lt.s32.totalorder %s23, 1
      %s293 = scalar_select %p292, %s23, 1
      %s294 = smul.addr %s291, 2
      %s295 = sadd.s32 %s293, %s294
      %s296 = smul.addr %s295, 8
      %s297 = scalar_lea.vmem %s5, %s296
      %p298 = pneg %p208
      %p299 = pneg %p205
      %p300 = scmp.lt.s32.totalorder %s22, 1
      %s301 = scalar_select %p300, %s22, 1
      %p302 = scmp.lt.s32.totalorder %s23, 1
      %s303 = scalar_select %p302, %s23, 1
      %s304 = smul.addr %s301, 2
      %s305 = sadd.s32 %s303, %s304
      %s306 = smul.addr %s305, 8
      %s307 = scalar_lea.vmem %s6, %s306
      %p308 = scmp.lt.s32.totalorder %s22, 1
      %s309 = scalar_select %p308, %s22, 1
      %s310 = smul.addr %s309, 3
      %s311 = smul.addr %s310, 8
      %s312 = scalar_lea.vmem %s0, %s311
      %p313 = scmp.lt.s32.totalorder %s23, 1
      %s314 = scalar_select %p313, %s23, 1
      %s315 = smul.addr %s314, 4
      %s316 = scalar_lea.vmem %s2, %s315
      %p317 = scmp.lt.s32.totalorder %s23, 1
      %s318 = scalar_select %p317, %s23, 1
      %s319 = scalar_lea.vmem %s3, %s318
      %p320 = scmp.lt.s32.totalorder %s22, 1
      %s321 = scalar_select %p320, %s22, 1
      %p322 = scmp.lt.s32.totalorder %s23, 1
      %s323 = scalar_select %p322, %s23, 1
      %s324 = smul.addr %s321, 2
      %s325 = sadd.s32 %s323, %s324
      %s326 = smul.addr %s325, 8
      %s327 = scalar_lea.vmem %s4, %s326
      %p328 = scmp.lt.s32.totalorder %s22, 1
      %s329 = scalar_select %p328, %s22, 1
      %p330 = scmp.lt.s32.totalorder %s23, 1
      %s331 = scalar_select %p330, %s23, 1
      %s332 = smul.addr %s329, 2
      %s333 = sadd.s32 %s331, %s332
      %s334 = smul.addr %s333, 8
      %s335 = scalar_lea.vmem %s5, %s334
      %p336 = scmp.lt.s32.totalorder %s22, 1
      %s337 = scalar_select %p336, %s22, 1
      %p338 = scmp.lt.s32.totalorder %s23, 1
      %s339 = scalar_select %p338, %s23, 1
      %s340 = smul.addr %s337, 2
      %s341 = sadd.s32 %s339, %s340
      %s342 = smul.addr %s341, 8
      %s343 = scalar_lea.vmem %s6, %s342
      %s344 = smul.u32 %s23, 128
      %s345 = sshra.s32 %s344, 7
      %s346 = sand.u32 %s344, 127
      %s347 = smul.addr %s345, 8
      %s348 = scalar_lea.vmem %s312, %s347
      %v349 = vld [vmem:[%s348] sm:$0xff]
      %v350 = vld [vmem:[%s348 + $0x8] sm:$0xff]
      %v351 = vld [vmem:[%s316] sm:$0x7]
      %v352 = vlaneseq
      %v353 = vshrl.u32 %v352, 7
      %v354 = vsub.s32 0, %v353
      %v355 = vrot.slane %v351, %v354
      %v356 = vmul.f32 %v349, %v355
      %v357 = vlaneseq
      %v358 = vshrl.u32 %v357, 7
      %v359 = vsub.s32 1, %v358
      %v360 = vrot.slane %v351, %v359
      %362 = vrot.lane.b32.xlu0 %v360, 1
      %v363 = vpop.permute.xlu0 %362
      %v365 = vmul.f32 %v349, %v363
      %v366 = vmul.f32 %v350, %v363
      %v367 = vlaneseq
      %v368 = vshrl.u32 %v367, 7
      %v369 = vsub.s32 2, %v368
      %v370 = vrot.slane %v351, %v369
      %372 = vrot.lane.b32.xlu0 %v370, 2
      %v373 = vpop.permute.xlu0 %372
      %v375 = vmul.f32 %v349, %v373
      %v376 = vmul.f32 %v350, %v373
      %378 = vrot.lane.b32.xlu0 %v355, 16
      %v379 = vpop.permute.xlu0 %378
      %v381 = vmul.f32 %v349, %v379
      %v382 = vmul.f32 %v350, %v379
      %383 = vrot.lane.b32.xlu0 %v360, 17
      %v384 = vpop.permute.xlu0 %383
      %v386 = vmul.f32 %v349, %v384
      %v387 = vmul.f32 %v350, %v384
      %388 = vrot.lane.b32.xlu0 %v370, 18
      %v389 = vpop.permute.xlu0 %388
      %v391 = vmul.f32 %v349, %v389
      %v392 = vmul.f32 %v350, %v389
      %393 = vrot.lane.b32.xlu0 %v355, 32
      %v394 = vpop.permute.xlu0 %393
      %v396 = vmul.f32 %v349, %v394
      %v397 = vmul.f32 %v350, %v394
      %398 = vrot.lane.b32.xlu0 %v360, 33
      %v399 = vpop.permute.xlu0 %398
      %v401 = vmul.f32 %v349, %v399
      %v402 = vmul.f32 %v350, %v399
      %403 = vrot.lane.b32.xlu0 %v370, 34
      %v404 = vpop.permute.xlu0 %403
      %v406 = vmul.f32 %v349, %v404
      %v407 = vmul.f32 %v350, %v404
      %410 = vrot.lane.b32.xlu0 %v365, 127
      %v411 = vpop.permute.xlu0 %410
      %412 = vrot.lane.b32.xlu0 %v366, 127
      %v413 = vpop.permute.xlu0 %412
      %vm414 = vcmask 1039360
      %v415 = vsel %vm414, %v411, %v413
      %419 = vrot.lane.b32.xlu0 %v375, 126
      %v420 = vpop.permute.xlu0 %419
      %421 = vrot.lane.b32.xlu0 %v376, 126
      %v422 = vpop.permute.xlu0 %421
      %vm423 = vcmask 1031168
      %v424 = vsel %vm423, %v420, %v422
      %428 = vrot.lane.b32.xlu0 %v381, 112
      %v429 = vpop.permute.xlu0 %428
      %430 = vrot.lane.b32.xlu0 %v382, 112
      %v431 = vpop.permute.xlu0 %430
      %vm432 = vcmask 916480
      %v433 = vsel %vm432, %v429, %v431
      %437 = vrot.lane.b32.xlu0 %v386, 111
      %v438 = vpop.permute.xlu0 %437
      %439 = vrot.lane.b32.xlu0 %v387, 111
      %v440 = vpop.permute.xlu0 %439
      %vm441 = vcmask 908288
      %v442 = vsel %vm441, %v438, %v440
      %446 = vrot.lane.b32.xlu0 %v391, 110
      %v447 = vpop.permute.xlu0 %446
      %448 = vrot.lane.b32.xlu0 %v392, 110
      %v449 = vpop.permute.xlu0 %448
      %vm450 = vcmask 900096
      %v451 = vsel %vm450, %v447, %v449
      %455 = vrot.lane.b32.xlu0 %v396, 96
      %v456 = vpop.permute.xlu0 %455
      %457 = vrot.lane.b32.xlu0 %v397, 96
      %v458 = vpop.permute.xlu0 %457
      %vm459 = vcmask 785408
      %v460 = vsel %vm459, %v456, %v458
      %464 = vrot.lane.b32.xlu0 %v401, 95
      %v465 = vpop.permute.xlu0 %464
      %466 = vrot.lane.b32.xlu0 %v402, 95
      %v467 = vpop.permute.xlu0 %466
      %vm468 = vcmask 777216
      %v469 = vsel %vm468, %v465, %v467
      %473 = vrot.lane.b32.xlu0 %v406, 94
      %v474 = vpop.permute.xlu0 %473
      %475 = vrot.lane.b32.xlu0 %v407, 94
      %v476 = vpop.permute.xlu0 %475
      %vm477 = vcmask 769024
      %v478 = vsel %vm477, %v474, %v476
      %v480 = vld [vmem:[%s1] sm:$0xff]
      %vm481 = vcmask 588800
      %v483 = vsel %vm481, %v480, 0
      %485 = vmatprep.subr.mxu0 0.0
      %486 = vmatpush1.msra.mxu0 %v356
      %487 = vmatprep.subr.mxu0 0.0
      %488 = vmatpush1.msra.mxu0 %v415
      %489 = vmatprep.subr.mxu0 0.0
      %490 = vmatpush1.msra.mxu0 %v424
      %491 = vmatprep.subr.mxu0 0.0
      %492 = vmatpush1.msra.mxu0 %v433
      %493 = vmatprep.subr.mxu0 0.0
      %494 = vmatpush1.msra.mxu0 %v442
      %495 = vmatprep.subr.mxu0 0.0
      %496 = vmatpush1.msra.mxu0 %v451
      %497 = vmatprep.subr.mxu0 0.0
      %498 = vmatpush1.msra.mxu0 %v460
      %499 = vmatprep.subr.mxu0 0.0
      %500 = vmatpush1.msra.mxu0 %v469
      %501 = vmatprep.subr.mxu0 0.0
      %502 = vmatpush1.msra.mxu0 %v478
      %503 = vmatprep.subr.mxu0 0.0
      %504 = vmatpush1.msra.mxu0 0.0
      %505 = vmatprep.subr.mxu0 0.0
      %506 = vmatpush1.msra.mxu0 0.0
      %507 = vmatprep.subr.mxu0 0.0
      %508 = vmatpush1.msra.mxu0 0.0
      %509 = vmatprep.subr.mxu0 0.0
      %510 = vmatpush1.msra.mxu0 0.0
      %511 = vmatprep.subr.mxu0 0.0
      %512 = vmatpush1.msra.mxu0 0.0
      %513 = vmatprep.subr.mxu0 0.0
      %514 = vmatpush1.msra.mxu0 0.0
      %515 = vmatprep.subr.mxu0 0.0
      %516 = vmatpush1.msra.mxu0 0.0
      %517 = vmatprep.subr.mxu0 0.0
      %518 = vmatpush1.msra.mxu0 0.0
      %519 = vmatprep.subr.mxu0 0.0
      %520 = vmatpush1.msra.mxu0 0.0
      %521 = vmatprep.subr.mxu0 0.0
      %522 = vmatpush1.msra.mxu0 0.0
      %523 = vmatprep.subr.mxu0 0.0
      %524 = vmatpush1.msra.mxu0 0.0
      %525 = vmatprep.subr.mxu0 0.0
      %526 = vmatpush1.msra.mxu0 0.0
      %527 = vmatprep.subr.mxu0 0.0
      %528 = vmatpush1.msra.mxu0 0.0
      %529 = vmatprep.subr.mxu0 0.0
      %530 = vmatpush1.msra.mxu0 0.0
      %531 = vmatprep.subr.mxu0 0.0
      %532 = vmatpush1.msra.mxu0 0.0
      %533 = vmatprep.subr.mxu0 0.0
      %534 = vmatpush1.msra.mxu0 0.0
      %535 = vmatprep.subr.mxu0 0.0
      %536 = vmatpush1.msra.mxu0 0.0
      %537 = vmatprep.subr.mxu0 0.0
      %538 = vmatpush1.msra.mxu0 0.0
      %539 = vmatprep.subr.mxu0 0.0
      %540 = vmatpush1.msra.mxu0 0.0
      %541 = vmatprep.subr.mxu0 0.0
      %542 = vmatpush1.msra.mxu0 0.0
      %543 = vmatprep.subr.mxu0 0.0
      %544 = vmatpush1.msra.mxu0 0.0
      %545 = vmatprep.subr.mxu0 0.0
      %546 = vmatpush1.msra.mxu0 0.0
      %547 = vmatprep.subr.mxu0 0.0
      %548 = vmatpush1.msra.mxu0 0.0
      %549 = vmatprep.mubr.f32.mxu0 0.0
      %550 = vmatmul.mubr.f32.gmra.mrb[0].mxu0 %v483
      %v551 = vpop.f32.mrb[0].mxu0
      %v552 = vadd.f32 0.0, %v551
      %v553 = vpop.f32.mrb[0].mxu0
      %554 = vdwg.mxu0
      %555 = vst [vmem:[%s327] sm:$0xff] %v552
      %v556 = vld [vmem:[%s319] sm:$0x1]
      %v558 = vlaneseq
      %v559 = vshrl.u32 %v558, 7
      %v560 = vsub.s32 0, %v559
      %v561 = vrot.slane %v556, %v560
      %v563 = vmul.f32 %v552, %v561
      %564 = vadd.xlane.f32.xlu0 %v563
      %v565 = vpop.xlane.xlu0 %564
      %vm566 = vcmask 7168
      %567 = vst.msk [vmem:[%s335] sm:$0xff] %vm566, %v565
      %v568 = vmul.f32 %v563, %v552
      %569 = vadd.xlane.f32.xlu0 %v568
      %v570 = vpop.xlane.xlu0 %569
      %571 = vst.msk [vmem:[%s343] sm:$0xff] %vm566, %v570
      %p572 = scmp.lt.s32.totalorder %s22, 1
      %s573 = scalar_select %p572, %s22, 1
      %p574 = scmp.lt.s32.totalorder %s23, 1
      %s575 = scalar_select %p574, %s23, 1
      %s576 = smul.addr %s573, 2
      %s577 = sadd.s32 %s575, %s576
      %s578 = smul.addr %s577, 8
      %s579 = scalar_lea.vmem %s4, %s578
      %p580 = scmp.lt.s32.totalorder %s22, 1
      %s581 = scalar_select %p580, %s22, 1
      %p582 = scmp.lt.s32.totalorder %s23, 1
      %s583 = scalar_select %p582, %s23, 1
      %s584 = smul.addr %s581, 2
      %s585 = sadd.s32 %s583, %s584
      %s586 = smul.addr %s585, 8
      %s587 = scalar_lea.vmem %s5, %s586
      %p588 = scmp.lt.s32.totalorder %s22, 1
      %s589 = scalar_select %p588, %s22, 1
      %p590 = scmp.lt.s32.totalorder %s23, 1
      %s591 = scalar_select %p590, %s23, 1
      %s592 = smul.addr %s589, 2
      %s593 = sadd.s32 %s591, %s592
      %s594 = smul.addr %s593, 8
      %s595 = scalar_lea.vmem %s6, %s594
      // Predicated region
      $region37: #{conv2d_batchnorm.2} parent=35 // pred_check
        %p596 = pneg %p149
      $region38: #{conv2d_batchnorm.2} parent=35 // pred_check_branch
        %598 = sbr.rel (%p596) target = $region40
      $region39: #{conv2d_batchnorm.2} parent=35 // pred_region
        _
      $region40: #{conv2d_batchnorm.2} parent=35 // pred_fallthru
        _
      // Predicated region
      $region41: #{conv2d_batchnorm.2} parent=35 // pred_check
        %p599 = pneg %p177
      $region42: #{conv2d_batchnorm.2} parent=35 // pred_check_branch
        %601 = sbr.rel (%p599) target = $region44
      $region43: #{conv2d_batchnorm.2} parent=35 // pred_region
        _
      $region44: #{conv2d_batchnorm.2} parent=35 // pred_fallthru
        _
      // Predicated region
      $region45: #{conv2d_batchnorm.2} parent=35 // pred_check
        %p602 = pneg %p205
      $region46: #{conv2d_batchnorm.2} parent=35 // pred_check_branch
        %604 = sbr.rel (%p602) target = $region48
      $region47: #{conv2d_batchnorm.2} parent=35 // pred_region
        _
      $region48: #{conv2d_batchnorm.2} parent=35 // pred_fallthru
        _
    $region36: #{conv2d_batchnorm.2} parent=5 // pred_fallthru
      _
    %p605 = scmp.le.s32.totalorder 2, %s13
    // Predicated region
    $region49: #{conv2d_batchnorm.2} parent=5 // pred_check
      %p606 = pneg %p605
    $region50: #{conv2d_batchnorm.2} parent=5 // pred_check_branch
      %608 = sbr.rel (%p606) target = $region52
    $region51: #{conv2d_batchnorm.2} parent=5 // pred_region
      %s609 = ssub.s32 %s13, 2
      // Predicated region
      $region53: #{conv2d_batchnorm.2} parent=51 // pred_check
        %p610 = pneg %p155
      $region54: #{conv2d_batchnorm.2} parent=51 // pred_check_branch
        %612 = sbr.rel (%p610) target = $region56
      $region55: #{conv2d_batchnorm.2} parent=51 // pred_region
        %p613 = scmp.lt.s32.totalorder %s24, 1
        %s614 = scalar_select %p613, %s24, 1
        %p615 = scmp.lt.s32.totalorder %s25, 1
        %s616 = scalar_select %p615, %s25, 1
        %s617 = smul.addr %s614, 2
        %s618 = sadd.s32 %s616, %s617
        %s619 = smul.addr %s618, 8
        %s620 = scalar_lea.vmem %s4, %s619
      $region56: #{conv2d_batchnorm.2} parent=51 // pred_fallthru
        _
      // Predicated region
      $region57: #{conv2d_batchnorm.2} parent=51 // pred_check
        %p621 = pneg %p183
      $region58: #{conv2d_batchnorm.2} parent=51 // pred_check_branch
        %623 = sbr.rel (%p621) target = $region60
      $region59: #{conv2d_batchnorm.2} parent=51 // pred_region
        %p624 = scmp.lt.s32.totalorder %s24, 1
        %s625 = scalar_select %p624, %s24, 1
        %p626 = scmp.lt.s32.totalorder %s25, 1
        %s627 = scalar_select %p626, %s25, 1
        %s628 = smul.addr %s625, 2
        %s629 = sadd.s32 %s627, %s628
        %s630 = smul.addr %s629, 8
        %s631 = scalar_lea.vmem %s5, %s630
      $region60: #{conv2d_batchnorm.2} parent=51 // pred_fallthru
        _
      // Predicated region
      $region61: #{conv2d_batchnorm.2} parent=51 // pred_check
        %p632 = pneg %p211
      $region62: #{conv2d_batchnorm.2} parent=51 // pred_check_branch
        %634 = sbr.rel (%p632) target = $region64
      $region63: #{conv2d_batchnorm.2} parent=51 // pred_region
        %p635 = scmp.lt.s32.totalorder %s24, 1
        %s636 = scalar_select %p635, %s24, 1
        %p637 = scmp.lt.s32.totalorder %s25, 1
        %s638 = scalar_select %p637, %s25, 1
        %s639 = smul.addr %s636, 2
        %s640 = sadd.s32 %s638, %s639
        %s641 = smul.addr %s640, 8
        %s642 = scalar_lea.vmem %s6, %s641
      $region64: #{conv2d_batchnorm.2} parent=51 // pred_fallthru
        _
    $region52: #{conv2d_batchnorm.2} parent=5 // pred_fallthru
      _
  $region6: #{conv2d_batchnorm.2} parent=0 // loop_footer
    %s17 = sadd.s32 1, %s13
  $region7: #{conv2d_batchnorm.2} parent=0 // loop_footer_branch
    %12 = sbr.rel target = $region3
  $region8: #{conv2d_batchnorm.2} parent=0 // loop_exit
    _

</llo_original>
